<compile_context>
chip_gen: v6e
topology: v6e:2x2x1
jax: 0.10.0
libtpu: 0.0.40
codegen_flags: <defaults>
</compile_context>

<pallas_src>
import functools

import jax
import jax.numpy as jnp
from jax.experimental import pallas as pl
from jax.experimental.pallas import tpu as pltpu

_NEG_BIG = -1e30  # stand-in for -inf on padded output lanes (exp underflows to exactly 0)


def _round_up(x, m):
    return (x + m - 1) // m * m


def _mlp_logsoftmax_kernel(x_ref, w1_ref, b1_ref, w2_ref, b2_ref, o_ref):
    # Both matmuls: bf16 operands in, f32 accumulation on the MXU.
    x = x_ref[...].astype(jnp.bfloat16)                                  # (TB, K_pad)
    h = jnp.dot(x, w1_ref[...], preferred_element_type=jnp.float32)      # (TB, 128)
    h = jnp.maximum(h + b1_ref[...], 0.0)                                # bias + ReLU in f32
    logits = jnp.dot(h.astype(jnp.bfloat16), w2_ref[...],
                     preferred_element_type=jnp.float32) + b2_ref[...]   # (TB, N_pad)
    # Padded output lanes carry a -1e30 bias: they never win the max and their exp() is 0,
    # so the N_pad-lane log-sum-exp equals the true dim_out-wide one.
    m = jnp.max(logits, axis=-1, keepdims=True)
    shifted = logits - m
    lse = jnp.log(jnp.sum(jnp.exp(shifted), axis=-1, keepdims=True))
    o_ref[...] = shifted - lse


@functools.partial(jax.jit, static_argnames=("dim_out",))
def simple_model_forward(x, w1, b1, w2, b2, *, dim_out):
    # x.view(x.shape[0], -1)
    B = x.shape[0]
    x2d = x.reshape(B, -1)
    dim_in = x2d.shape[1]
    hidden = w1.shape[1]                      # 128 per the module spec

    k_pad = _round_up(dim_in, 128)            # lane-dense K (zero padding is exact)
    n_pad = _round_up(dim_out, 128)           # lane-dense output / dense N for matmul #2

    # Batch tile: as large as a ~12 MiB VMEM budget allows (double-buffered f32 x/out tiles plus
    # resident bf16 weights), capped at 512 rows.  Fills the MXU and amortizes the per-grid-step
    # overhead while staying inside the default scoped-VMEM limit on all chips.
    budget = 12 * 1024 * 1024
    resident = k_pad * hidden * 2 + hidden * n_pad * 2 + hidden * 4 + n_pad * 4
    per_row = 2 * 4 * k_pad + 2 * 4 * n_pad   # x + out, both double-buffered, f32
    tb_vmem = max(8, (budget - resident) // per_row // 8 * 8)
    # TODO(synk): for extremely large flattened dim_in the resident w1 itself can exceed VMEM;
    # that case would need a K-tiled (reduction-axis) grid, which this model never hits.
    tb = min(512, tb_vmem, _round_up(B, 8))
    b_pad = _round_up(B, tb)

    if b_pad != B or k_pad != dim_in:
        x2d = jnp.pad(x2d, ((0, b_pad - B), (0, k_pad - dim_in)))

    # Weights: pad + cast to bf16 once in the wrapper (tiny, VMEM-resident across the grid).
    w1p = jnp.pad(w1.astype(jnp.float32),
                  ((0, k_pad - dim_in), (0, 0))).astype(jnp.bfloat16)
    w2p = jnp.pad(w2.astype(jnp.float32),
                  ((0, 0), (0, n_pad - dim_out))).astype(jnp.bfloat16)
    b1p = b1.reshape(1, hidden).astype(jnp.float32)
    b2p = jnp.pad(b2.reshape(1, dim_out).astype(jnp.float32),
                  ((0, 0), (0, n_pad - dim_out)), constant_values=_NEG_BIG)

    out = pl.pallas_call(
        _mlp_logsoftmax_kernel,
        out_shape=jax.ShapeDtypeStruct((b_pad, n_pad), jnp.float32),
        grid_spec=pltpu.PrefetchScalarGridSpec(
            num_scalar_prefetch=0,
            grid=(b_pad // tb,),
            in_specs=[
                pl.BlockSpec((tb, k_pad), lambda i: (i, 0)),       # x: streamed batch tiles
                pl.BlockSpec((k_pad, hidden), lambda i: (0, 0)),   # w1: resident
                pl.BlockSpec((1, hidden), lambda i: (0, 0)),       # b1: resident
                pl.BlockSpec((hidden, n_pad), lambda i: (0, 0)),   # w2: resident
                pl.BlockSpec((1, n_pad), lambda i: (0, 0)),        # b2: resident (-1e30 pad)
            ],
            out_specs=pl.BlockSpec((tb, n_pad), lambda i: (i, 0)),
        ),
        compiler_params=pltpu.CompilerParams(
            dimension_semantics=("parallel",),   # shard batch tiles across TCs on v7x
        ),
    )(x2d, w1p, b1p, w2p, b2p)
    return out[:B, :dim_out]


def init_params(key, dim_in, dim_out, hidden=128):
    # Deterministic synthetic init (uniform, torch-Linear-style bound 1/sqrt(fan_in)).
    # Weights stored transposed vs PyTorch: W1 (dim_in, 128), W2 (128, dim_out).
    k1, k2, k3, k4 = jax.random.split(key, 4)
    bound1 = 1.0 / (dim_in ** 0.5)
    bound2 = 1.0 / (hidden ** 0.5)
    w1 = jax.random.uniform(k1, (dim_in, hidden), jnp.float32, -bound1, bound1)
    b1 = jax.random.uniform(k2, (1, hidden), jnp.float32, -bound1, bound1)
    w2 = jax.random.uniform(k3, (hidden, dim_out), jnp.float32, -bound2, bound2)
    b2 = jax.random.uniform(k4, (1, dim_out), jnp.float32, -bound2, bound2)
    return w1, b1, w2, b2


if __name__ == "__main__":
    key = jax.random.PRNGKey(0)
    kx, kp = jax.random.split(key)

    batch, dim_in, dim_out = 8, 64, 10
    x = jax.random.normal(kx, (batch, dim_in), jnp.float32)
    w1, b1, w2, b2 = init_params(kp, dim_in, dim_out)

    def reference(xa):
        h = jnp.maximum(xa.reshape(xa.shape[0], -1) @ w1 + b1, 0.0)
        return jax.nn.log_softmax(h @ w2 + b2, axis=1)

    out = simple_model_forward(x, w1, b1, w2, b2, dim_out=dim_out)
    jax.block_until_ready(out)
    ref = reference(x)
    assert out.shape == ref.shape
    # bf16 MXU operands -> compare against the f32 reference with a matching tolerance.
    assert jnp.allclose(out, ref, atol=5e-2, rtol=0.0), "mismatch vs reference"

    # Multi-dimensional input (exercise the x.view flatten path): (2, 4, 4, 4) -> (2, 64).
    x4d = jax.random.normal(jax.random.PRNGKey(2), (2, 4, 4, 4), jnp.float32)
    out4 = simple_model_forward(x4d, w1, b1, w2, b2, dim_out=dim_out)
    jax.block_until_ready(out4)
    ref4 = reference(x4d.reshape(2, -1))
    assert jnp.allclose(out4, ref4, atol=5e-2, rtol=0.0), "mismatch vs reference (4d input)"

    # Exercise the multi-step tiled-grid path (batch > tile, batch not a multiple of the tile).
    xb = jax.random.normal(jax.random.PRNGKey(1), (1040, dim_in), jnp.float32)
    outb = simple_model_forward(xb, w1, b1, w2, b2, dim_out=dim_out)
    jax.block_until_ready(outb)
    refb = reference(xb)
    assert jnp.allclose(outb, refb, atol=5e-2, rtol=0.0), "mismatch vs reference (tiled)"

    print("KERNEL_OK")
</pallas_src>

<mosaic_0001>
module attributes {stable_mosaic.version = 11 : i64} {
  func.func @_mlp_logsoftmax_kernel(%arg0: i32, %arg1: memref<8x128xf32, #tpu.memory_space<vmem>>, %arg2: memref<128x128xbf16, #tpu.memory_space<vmem>>, %arg3: memref<1x128xf32, #tpu.memory_space<vmem>>, %arg4: memref<128x128xbf16, #tpu.memory_space<vmem>>, %arg5: memref<1x128xf32, #tpu.memory_space<vmem>>, %arg6: memref<8x128xf32, #tpu.memory_space<vmem>>) attributes {dimension_semantics = [#tpu.dimension_semantics<parallel>], iteration_bounds = array<i64: 1>, scalar_prefetch = 0 : i64, scratch_operands = 0 : i64, tpu.core_type = #tpu.core_type<tc>, window_params = [{transform_indices = @transform_0, window_bounds = array<i64: 8, 128>}, {pipeline_mode = #tpu.pipeline_mode<synchronous>, transform_indices = @transform_1, window_bounds = array<i64: 128, 128>}, {pipeline_mode = #tpu.pipeline_mode<synchronous>, transform_indices = @transform_2, window_bounds = array<i64: 1, 128>}, {pipeline_mode = #tpu.pipeline_mode<synchronous>, transform_indices = @transform_3, window_bounds = array<i64: 128, 128>}, {pipeline_mode = #tpu.pipeline_mode<synchronous>, transform_indices = @transform_4, window_bounds = array<i64: 1, 128>}, {transform_indices = @transform_5, window_bounds = array<i64: 8, 128>}]} {
    %c0 = arith.constant 0 : index
    %c0_0 = arith.constant 0 : index
    %0 = vector.load %arg1[%c0, %c0_0] : memref<8x128xf32, #tpu.memory_space<vmem>>, vector<8x128xf32>
    %1 = arith.truncf %0 : vector<8x128xf32> to vector<8x128xbf16>
    %c0_1 = arith.constant 0 : index
    %c0_2 = arith.constant 0 : index
    %2 = vector.load %arg2[%c0_1, %c0_2] : memref<128x128xbf16, #tpu.memory_space<vmem>>, vector<128x128xbf16>
    %cst = arith.constant dense<0.000000e+00> : vector<8x128xf32>
    %3 = tpu.matmul %1, %2, %cst {dimension_numbers = #tpu.dot_dimension_numbers<[1], [0], [0], [1], [0, 0, 1, 1], [], []>} : vector<8x128xbf16>, vector<128x128xbf16>, vector<8x128xf32> -> vector<8x128xf32>
    %c0_3 = arith.constant 0 : index
    %c0_4 = arith.constant 0 : index
    %4 = vector.load %arg3[%c0_3, %c0_4] : memref<1x128xf32, #tpu.memory_space<vmem>>, vector<1x128xf32>
    %5 = vector.broadcast %4 : vector<1x128xf32> to vector<8x128xf32>
    %6 = arith.addf %3, %5 : vector<8x128xf32>
    %cst_5 = arith.constant 0.000000e+00 : f32
    %7 = vector.broadcast %cst_5 : f32 to vector<8x128xf32>
    %8 = arith.maximumf %6, %7 : vector<8x128xf32>
    %9 = arith.truncf %8 : vector<8x128xf32> to vector<8x128xbf16>
    %c0_6 = arith.constant 0 : index
    %c0_7 = arith.constant 0 : index
    %10 = vector.load %arg4[%c0_6, %c0_7] : memref<128x128xbf16, #tpu.memory_space<vmem>>, vector<128x128xbf16>
    %cst_8 = arith.constant dense<0.000000e+00> : vector<8x128xf32>
    %11 = tpu.matmul %9, %10, %cst_8 {dimension_numbers = #tpu.dot_dimension_numbers<[1], [0], [0], [1], [0, 0, 1, 1], [], []>} : vector<8x128xbf16>, vector<128x128xbf16>, vector<8x128xf32> -> vector<8x128xf32>
    %c0_9 = arith.constant 0 : index
    %c0_10 = arith.constant 0 : index
    %12 = vector.load %arg5[%c0_9, %c0_10] : memref<1x128xf32, #tpu.memory_space<vmem>>, vector<1x128xf32>
    %13 = vector.broadcast %12 : vector<1x128xf32> to vector<8x128xf32>
    %14 = arith.addf %11, %13 : vector<8x128xf32>
    %cst_11 = arith.constant dense<0xFF800000> : vector<8xf32>
    %15 = vector.multi_reduction <maximumf>, %14, %cst_11 [1] : vector<8x128xf32> to vector<8xf32>
    %16 = vector.shape_cast %15 : vector<8xf32> to vector<8x1xf32>
    %17 = vector.broadcast %16 : vector<8x1xf32> to vector<8x128xf32>
    %18 = arith.subf %14, %17 : vector<8x128xf32>
    %19 = math.exp %18 : vector<8x128xf32>
    %cst_12 = arith.constant dense<0.000000e+00> : vector<8xf32>
    %20 = vector.multi_reduction <add>, %19, %cst_12 [1] : vector<8x128xf32> to vector<8xf32>
    %21 = vector.shape_cast %20 : vector<8xf32> to vector<8x1xf32>
    %22 = math.log %21 : vector<8x1xf32>
    %23 = vector.broadcast %22 : vector<8x1xf32> to vector<8x128xf32>
    %24 = arith.subf %18, %23 : vector<8x128xf32>
    %c0_13 = arith.constant 0 : index
    %c0_14 = arith.constant 0 : index
    %25 = vector.load %arg6[%c0_13, %c0_14] : memref<8x128xf32, #tpu.memory_space<vmem>>, vector<8x128xf32>
    tpu.vector_store %arg6[%c0_13, %c0_14], %24 {strides = array<i32>} : memref<8x128xf32, #tpu.memory_space<vmem>>, vector<8x128xf32>,
    return
  }
  func.func @transform_0(%arg0: i32) -> (i32, i32) {
    %c0_i32 = arith.constant 0 : i32
    %c0_i32_0 = arith.constant 0 : i32
    return %arg0, %c0_i32 : i32, i32
  }
  func.func @transform_1(%arg0: i32) -> (i32, i32) {
    %c0_i32 = arith.constant 0 : i32
    %c0_i32_0 = arith.constant 0 : i32
    %c0_i32_1 = arith.constant 0 : i32
    return %c0_i32, %c0_i32_0 : i32, i32
  }
  func.func @transform_2(%arg0: i32) -> (i32, i32) {
    %c0_i32 = arith.constant 0 : i32
    %c0_i32_0 = arith.constant 0 : i32
    %c0_i32_1 = arith.constant 0 : i32
    return %c0_i32, %c0_i32_0 : i32, i32
  }
  func.func @transform_3(%arg0: i32) -> (i32, i32) {
    %c0_i32 = arith.constant 0 : i32
    %c0_i32_0 = arith.constant 0 : i32
    %c0_i32_1 = arith.constant 0 : i32
    return %c0_i32, %c0_i32_0 : i32, i32
  }
  func.func @transform_4(%arg0: i32) -> (i32, i32) {
    %c0_i32 = arith.constant 0 : i32
    %c0_i32_0 = arith.constant 0 : i32
    %c0_i32_1 = arith.constant 0 : i32
    return %c0_i32, %c0_i32_0 : i32, i32
  }
  func.func @transform_5(%arg0: i32) -> (i32, i32) {
    %c0_i32 = arith.constant 0 : i32
    %c0_i32_0 = arith.constant 0 : i32
    return %arg0, %c0_i32 : i32, i32
  }
}

</mosaic_0001>

<llo_original>
// kernel: simple_model_forward.1
$region0: #{simple_model_forward.1}
  #allocation0 [shape = 'u32[]', space=smem, size = 0x4, offset = 0x4, fixed_abs, tag = 'smem constant byte address 0x4 - core index']
  #allocation1 [shape = 'u32[144,128]{1,0:T(1,128)}', space=vmem, size = 0x12000, scoped, tag = 'internal scratch']
  %s0 = inlined_call_operand.vmem [shape: f32[8,128], index: 0, kind: input, shape index: {}]
  %s1 = inlined_call_operand.vmem [shape: bf16[128,128], index: 1, kind: input, shape index: {}]
  %s2 = inlined_call_operand.vmem [shape: f32[1,128], index: 2, kind: input, shape index: {}]
  %s3 = inlined_call_operand.vmem [shape: bf16[128,128], index: 3, kind: input, shape index: {}]
  %s4 = inlined_call_operand.vmem [shape: f32[1,128], index: 4, kind: input, shape index: {}]
  %s5 = inlined_call_operand.hbm [shape: f32[8,128], index: 5, kind: output, shape index: {}]
  %s6 = sld [smem:[#allocation0]]
  $region30: #{simple_model_forward.1} parent=0
    _
  %s8 = ssub.s32 1, %s6
  %s9 = scalar_select 0, %s8, %s6
  $region1: #{simple_model_forward.1} parent=0
    #allocation2 [shape = 'u8[4096]{0}', space=vmem, size = 0x1000, scoped, tag = 'output window, operand 0, single buffered']
    #allocation3 [shape = 's32[1]{0}', space=sflag, size = 0x4, scoped, tag = 'scoped memory for simple_model_forward.1']
    %10 = vsyncpa [#allocation3], 0
    // Predicated region
    $region2: #{simple_model_forward.1} parent=1 // pred_check
      _
    $region3: #{simple_model_forward.1} parent=1 // pred_check_branch
      %12 = sbr.rel (0) target = $region5
    $region4: #{simple_model_forward.1} parent=1 // pred_region
      _
    $region5: #{simple_model_forward.1} parent=1 // pred_fallthru
      _
    // Predicated region
    $region6: #{simple_model_forward.1} parent=1 // pred_check
      _
    $region7: #{simple_model_forward.1} parent=1 // pred_check_branch
      %14 = sbr.rel (0) target = $region9
    $region8: #{simple_model_forward.1} parent=1 // pred_region
      _
    $region9: #{simple_model_forward.1} parent=1 // pred_fallthru
      _
    // Predicated region
    $region10: #{simple_model_forward.1} parent=1 // pred_check
      _
    $region11: #{simple_model_forward.1} parent=1 // pred_check_branch
      %16 = sbr.rel (0) target = $region13
    $region12: #{simple_model_forward.1} parent=1 // pred_region
      _
    $region13: #{simple_model_forward.1} parent=1 // pred_fallthru
      _
    // Predicated region
    $region14: #{simple_model_forward.1} parent=1 // pred_check
      _
    $region15: #{simple_model_forward.1} parent=1 // pred_check_branch
      %18 = sbr.rel (0) target = $region17
    $region16: #{simple_model_forward.1} parent=1 // pred_region
      _
    $region17: #{simple_model_forward.1} parent=1 // pred_fallthru
      _
    // Predicated region
    $region18: #{simple_model_forward.1} parent=1 // pred_check
      _
    $region19: #{simple_model_forward.1} parent=1 // pred_check_branch
      %20 = sbr.rel (0) target = $region21
    $region20: #{simple_model_forward.1} parent=1 // pred_region
      _
    $region21: #{simple_model_forward.1} parent=1 // pred_fallthru
      _
    %v22 = vld [vmem:[%s0] sm:$0xff]
    %v23 = vpack.c.bf16 %v22, %v22
    %v24 = vld [vmem:[%s1] sm:$0xf]
    %v25 = vld [vmem:[%s1 + $0x4] sm:$0xf]
    %v26 = vld [vmem:[%s1 + $0x8] sm:$0xf]
    %v27 = vld [vmem:[%s1 + $0xc] sm:$0xf]
    %v28 = vld [vmem:[%s1 + $0x10] sm:$0xf]
    %v29 = vld [vmem:[%s1 + $0x14] sm:$0xf]
    %v30 = vld [vmem:[%s1 + $0x18] sm:$0xf]
    %v31 = vld [vmem:[%s1 + $0x1c] sm:$0xf]
    %v32 = vld [vmem:[%s1 + $0x20] sm:$0xf]
    %v33 = vld [vmem:[%s1 + $0x24] sm:$0xf]
    %v34 = vld [vmem:[%s1 + $0x28] sm:$0xf]
    %v35 = vld [vmem:[%s1 + $0x2c] sm:$0xf]
    %v36 = vld [vmem:[%s1 + $0x30] sm:$0xf]
    %v37 = vld [vmem:[%s1 + $0x34] sm:$0xf]
    %v38 = vld [vmem:[%s1 + $0x38] sm:$0xf]
    %v39 = vld [vmem:[%s1 + $0x3c] sm:$0xf]
    %v40 = vld [vmem:[%s2] sm:$0x1]
    %v42 = vlaneseq
    %v43 = vshrl.u32 %v42, 7
    %v44 = vsub.s32 0, %v43
    %v45 = vrot.slane %v40, %v44
    %v63 = vunpack.c.l.b16 %v24
    %v64 = vunpack.c.l.b16 %v25
    %v65 = vunpack.c.l.b16 %v26
    %v66 = vunpack.c.l.b16 %v27
    %v67 = vunpack.c.l.b16 %v28
    %v68 = vunpack.c.l.b16 %v29
    %v69 = vunpack.c.l.b16 %v30
    %v70 = vunpack.c.l.b16 %v31
    %v71 = vunpack.c.l.b16 %v32
    %v72 = vunpack.c.l.b16 %v33
    %v73 = vunpack.c.l.b16 %v34
    %v74 = vunpack.c.l.b16 %v35
    %v75 = vunpack.c.l.b16 %v36
    %v76 = vunpack.c.l.b16 %v37
    %v77 = vunpack.c.l.b16 %v38
    %v78 = vunpack.c.l.b16 %v39
    %v79 = vpack.c.b16 %v64, %v63
    %v80 = vpack.c.b16 %v66, %v65
    %v81 = vpack.c.b16 %v68, %v67
    %v82 = vpack.c.b16 %v70, %v69
    %v83 = vpack.c.b16 %v72, %v71
    %v84 = vpack.c.b16 %v74, %v73
    %v85 = vpack.c.b16 %v76, %v75
    %v86 = vpack.c.b16 %v78, %v77
    %95 = vmatprep.subr.bf16.mxu0 0
    %96 = vmatpush1.bf16.msra.mxu0 %v86
    %97 = vmatprep.subr.bf16.mxu0 0
    %98 = vmatpush1.bf16.msra.mxu0 %v85
    %99 = vmatprep.subr.bf16.mxu0 0
    %100 = vmatpush1.bf16.msra.mxu0 %v84
    %101 = vmatprep.subr.bf16.mxu0 0
    %102 = vmatpush1.bf16.msra.mxu0 %v83
    %103 = vmatprep.subr.bf16.mxu0 0
    %104 = vmatpush1.bf16.msra.mxu0 %v82
    %105 = vmatprep.subr.bf16.mxu0 0
    %106 = vmatpush1.bf16.msra.mxu0 %v81
    %107 = vmatprep.subr.bf16.mxu0 0
    %108 = vmatpush1.bf16.msra.mxu0 %v80
    %109 = vmatprep.subr.bf16.mxu0 0
    %110 = vmatpush1.bf16.msra.mxu0 %v79
    %111 = vmatprep.subr.bf16.mxu0 0
    %112 = vmatpush2.bf16.msra.mxu0 0
    %113 = vmatprep.subr.bf16.mxu0 0
    %114 = vmatpush2.bf16.msra.mxu0 0
    %115 = vmatprep.subr.bf16.mxu0 0
    %116 = vmatpush2.bf16.msra.mxu0 0
    %117 = vmatprep.subr.bf16.mxu0 0
    %118 = vmatpush2.bf16.msra.mxu0 0
    %119 = vmatprep.subr.bf16.mxu0 0
    %120 = vmatpush2.bf16.msra.mxu0 0
    %121 = vmatprep.subr.bf16.mxu0 0
    %122 = vmatpush2.bf16.msra.mxu0 0
    %123 = vmatprep.subr.bf16.mxu0 0
    %124 = vmatpush2.bf16.msra.mxu0 0
    %125 = vmatprep.subr.bf16.mxu0 0
    %126 = vmatpush2.bf16.msra.mxu0 0
    %127 = vmatprep.mubr.bf16.mxu0 0
    %128 = vmatmul.mubr.bf16.gmra.mxu0 %v23
    %v129 = vpop.f32.mrf.mxu0
    %v130 = vadd.f32 %v45, %v129
    %v131 = vpop.f32.mrf.mxu0
    %v132 = vpop.f32.mrf.mxu0
    %v133 = vpop.f32.mrf.mxu0
    %134 = vdwg.mxu0
    %v135 = vmax.f32 %v130, 0.0
    %v136 = vpack.c.bf16 %v135, %v135
    %v137 = vld [vmem:[%s3] sm:$0xf]
    %v138 = vld [vmem:[%s3 + $0x4] sm:$0xf]
    %v139 = vld [vmem:[%s3 + $0x8] sm:$0xf]
    %v140 = vld [vmem:[%s3 + $0xc] sm:$0xf]
    %v141 = vld [vmem:[%s3 + $0x10] sm:$0xf]
    %v142 = vld [vmem:[%s3 + $0x14] sm:$0xf]
    %v143 = vld [vmem:[%s3 + $0x18] sm:$0xf]
    %v144 = vld [vmem:[%s3 + $0x1c] sm:$0xf]
    %v145 = vld [vmem:[%s3 + $0x20] sm:$0xf]
    %v146 = vld [vmem:[%s3 + $0x24] sm:$0xf]
    %v147 = vld [vmem:[%s3 + $0x28] sm:$0xf]
    %v148 = vld [vmem:[%s3 + $0x2c] sm:$0xf]
    %v149 = vld [vmem:[%s3 + $0x30] sm:$0xf]
    %v150 = vld [vmem:[%s3 + $0x34] sm:$0xf]
    %v151 = vld [vmem:[%s3 + $0x38] sm:$0xf]
    %v152 = vld [vmem:[%s3 + $0x3c] sm:$0xf]
    %v153 = vld [vmem:[%s4] sm:$0x1]
    %v155 = vlaneseq
    %v156 = vshrl.u32 %v155, 7
    %v157 = vsub.s32 0, %v156
    %v158 = vrot.slane %v153, %v157
    %v176 = vunpack.c.l.b16 %v137
    %v177 = vunpack.c.l.b16 %v138
    %v178 = vunpack.c.l.b16 %v139
    %v179 = vunpack.c.l.b16 %v140
    %v180 = vunpack.c.l.b16 %v141
    %v181 = vunpack.c.l.b16 %v142
    %v182 = vunpack.c.l.b16 %v143
    %v183 = vunpack.c.l.b16 %v144
    %v184 = vunpack.c.l.b16 %v145
    %v185 = vunpack.c.l.b16 %v146
    %v186 = vunpack.c.l.b16 %v147
    %v187 = vunpack.c.l.b16 %v148
    %v188 = vunpack.c.l.b16 %v149
    %v189 = vunpack.c.l.b16 %v150
    %v190 = vunpack.c.l.b16 %v151
    %v191 = vunpack.c.l.b16 %v152
    %v192 = vpack.c.b16 %v177, %v176
    %v193 = vpack.c.b16 %v179, %v178
    %v194 = vpack.c.b16 %v181, %v180
    %v195 = vpack.c.b16 %v183, %v182
    %v196 = vpack.c.b16 %v185, %v184
    %v197 = vpack.c.b16 %v187, %v186
    %v198 = vpack.c.b16 %v189, %v188
    %v199 = vpack.c.b16 %v191, %v190
    %208 = vmatprep.subr.bf16.mxu0 0
    %209 = vmatpush1.bf16.msra.mxu0 %v199
    %210 = vmatprep.subr.bf16.mxu0 0
    %211 = vmatpush1.bf16.msra.mxu0 %v198
    %212 = vmatprep.subr.bf16.mxu0 0
    %213 = vmatpush1.bf16.msra.mxu0 %v197
    %214 = vmatprep.subr.bf16.mxu0 0
    %215 = vmatpush1.bf16.msra.mxu0 %v196
    %216 = vmatprep.subr.bf16.mxu0 0
    %217 = vmatpush1.bf16.msra.mxu0 %v195
    %218 = vmatprep.subr.bf16.mxu0 0
    %219 = vmatpush1.bf16.msra.mxu0 %v194
    %220 = vmatprep.subr.bf16.mxu0 0
    %221 = vmatpush1.bf16.msra.mxu0 %v193
    %222 = vmatprep.subr.bf16.mxu0 0
    %223 = vmatpush1.bf16.msra.mxu0 %v192
    %224 = vmatprep.subr.bf16.mxu0 0
    %225 = vmatpush2.bf16.msra.mxu0 0
    %226 = vmatprep.subr.bf16.mxu0 0
    %227 = vmatpush2.bf16.msra.mxu0 0
    %228 = vmatprep.subr.bf16.mxu0 0
    %229 = vmatpush2.bf16.msra.mxu0 0
    %230 = vmatprep.subr.bf16.mxu0 0
    %231 = vmatpush2.bf16.msra.mxu0 0
    %232 = vmatprep.subr.bf16.mxu0 0
    %233 = vmatpush2.bf16.msra.mxu0 0
    %234 = vmatprep.subr.bf16.mxu0 0
    %235 = vmatpush2.bf16.msra.mxu0 0
    %236 = vmatprep.subr.bf16.mxu0 0
    %237 = vmatpush2.bf16.msra.mxu0 0
    %238 = vmatprep.subr.bf16.mxu0 0
    %239 = vmatpush2.bf16.msra.mxu0 0
    %240 = vmatprep.mubr.bf16.mxu0 0
    %241 = vmatmul.mubr.bf16.gmra.mxu0 %v136
    %v242 = vpop.f32.mrf.mxu0
    %v243 = vadd.f32 %v158, %v242
    %v244 = vpop.f32.mrf.mxu0
    %v245 = vpop.f32.mrf.mxu0
    %v246 = vpop.f32.mrf.mxu0
    %247 = vdwg.mxu0
    %248 = vmax.xlane.f32.xlu0 %v243
    %v249 = vpop.xlane.xlu0 %248
    %v250 = vsub.f32 %v243, %v249
    %v251 = vmul.f32 %v250, 1.442695
    %v252 = vpow.pop %v251
    %253 = vadd.xlane.f32.xlu0 %v252
    %v254 = vpop.xlane.xlu0 %253
    %v255 = vlog2.pop %v254
    %v256 = vmul.f32 %v255, 0.6931472
    %v257 = vsub.f32 %v250, %v256
    %258 = vst [vmem:[#allocation2] sm:$0xff] %v257
    // Predicated region
    $region22: #{simple_model_forward.1} parent=1 // pred_check
      _
    $region23: #{simple_model_forward.1} parent=1 // pred_check_branch
      %260 = sbr.rel (0) target = $region25
    $region24: #{simple_model_forward.1} parent=1 // pred_region
      %s262 = ssub.s32 128, 128
      %263 = vsyncadd [#allocation3], %s262
      %s265 = sshll.u32 [#allocation2], 4
      %s266 = int_to_ptr.vmem [resolvable:$true] %s265
      %268 = dma.vmem_to_hbm [thread:$0]  %s266, 128, %s5, [#allocation3]
    $region25: #{simple_model_forward.1} parent=1 // pred_fallthru
      _
    // Predicated region
    $region26: #{simple_model_forward.1} parent=1 // pred_check
      _
    $region27: #{simple_model_forward.1} parent=1 // pred_check_branch
      %270 = sbr.rel (0) target = $region29
    $region28: #{simple_model_forward.1} parent=1 // pred_region
      %271 = dma.done [#allocation3], 128
    $region29: #{simple_model_forward.1} parent=1 // pred_fallthru
      _
    %272 = vsyncpa [#allocation3], 1

</llo_original>
